<compile_context>
chip_gen: v5e
topology: v5e:2x2
jax: 0.10.0
libtpu: 0.0.40
codegen_flags: <defaults>
</compile_context>

<pallas_src>
import jax
import jax.numpy as jnp
from jax import lax
from jax.experimental import pallas as pl
from jax.experimental.pallas import tpu as pltpu


# ----------------------------------------------------------------------------
# Shared gate math (gate order [i, f, o, g]: one sigmoid slice, one tanh slice).
# ----------------------------------------------------------------------------
def _apply_gates(gates, c, hidden):
    sig = jax.nn.sigmoid(gates[:, :3 * hidden])          # i, f, o together
    g_g = jnp.tanh(gates[:, 3 * hidden:])                # g
    i_g = sig[:, 0 * hidden:1 * hidden]
    f_g = sig[:, 1 * hidden:2 * hidden]
    o_g = sig[:, 2 * hidden:3 * hidden]
    c_new = f_g * c + i_g * g_g
    h_new = o_g * jnp.tanh(c_new)
    return h_new, c_new


# ----------------------------------------------------------------------------
# Single-step kernel: matches EncoderRNN.forward(x, hidden) exactly.
# ----------------------------------------------------------------------------
def _encoder_step_kernel(x_ref, h_ref, c_ref,
                         w1_ref, b1_ref, wih_ref, whh_ref, bg_ref,
                         h_out_ref, c_out_ref):
    emb = jnp.maximum(
        jnp.dot(x_ref[...], w1_ref[...], preferred_element_type=jnp.float32)
        + b1_ref[...], 0.0)
    gates = (jnp.dot(emb, wih_ref[...], preferred_element_type=jnp.float32)
             + jnp.dot(h_ref[...], whh_ref[...],
                       preferred_element_type=jnp.float32)
             + bg_ref[...])
    h_new, c_new = _apply_gates(gates, c_ref[...], h_ref.shape[1])
    h_out_ref[...] = h_new
    c_out_ref[...] = c_new


def encoder_rnn_forward(x, hidden, params):
    """One EncoderRNN step: (h', c') = LSTMCell(relu(Linear(x)), (h, c)).

    NOTE: h/c inputs are donated in place (input_output_aliases); callers that
    still need the old hidden state must copy it before calling.
    """
    h, c = hidden
    B, H = h.shape
    out_shape = (jax.ShapeDtypeStruct((B, H), jnp.float32),
                 jax.ShapeDtypeStruct((B, H), jnp.float32))
    return pl.pallas_call(
        _encoder_step_kernel,
        out_shape=out_shape,
        input_output_aliases={1: 0, 2: 1},   # h -> h_out, c -> c_out
    )(x, h, c, params["w1_t"], params["b1"],
      params["w_ihg"], params["w_hhg"], params["b_gates"])


# ----------------------------------------------------------------------------
# Phase 1: gates_x = relu(x @ W1 + b1) @ W_ih^T + (b_ih + b_hh), all timesteps.
# ----------------------------------------------------------------------------
def _gates_x_kernel(x_ref, w1_ref, b1_ref, wih_ref, bg_ref, gx_ref):
    emb = jnp.maximum(
        jnp.dot(x_ref[...], w1_ref[...], preferred_element_type=jnp.float32)
        + b1_ref[...], 0.0)
    gx_ref[...] = (jnp.dot(emb, wih_ref[...],
                           preferred_element_type=jnp.float32)
                   + bg_ref[...])


def _compute_gates_x(xs_flat, params):
    rows, I = xs_flat.shape
    E = params["w1_t"].shape[1]
    G = params["w_ihg"].shape[1]
    # Row-tile at real sizes (>=512-row blocks, ~85% HBM roofline); one block
    # when small or non-divisible (toy case: rows = T*B = 16).
    block_rows = 512 if (rows >= 512 and rows % 512 == 0) else rows
    return pl.pallas_call(
        _gates_x_kernel,
        out_shape=jax.ShapeDtypeStruct((rows, G), jnp.float32),
        grid_spec=pltpu.PrefetchScalarGridSpec(
            num_scalar_prefetch=0,
            grid=(rows // block_rows,),
            in_specs=[
                pl.BlockSpec((block_rows, I), lambda r: (r, 0)),   # x rows
                pl.BlockSpec((I, E), lambda r: (0, 0)),            # W1^T
                pl.BlockSpec((1, E), lambda r: (0, 0)),            # b1
                pl.BlockSpec((E, G), lambda r: (0, 0)),            # W_ih^T (perm)
                pl.BlockSpec((1, G), lambda r: (0, 0)),            # b_ih+b_hh
            ],
            out_specs=pl.BlockSpec((block_rows, G), lambda r: (r, 0)),
        ),
        compiler_params=pltpu.CompilerParams(
            dimension_semantics=("parallel",)),
    )(xs_flat, params["w1_t"], params["b1"],
      params["w_ihg"], params["b_gates"])


# ----------------------------------------------------------------------------
# Phase 2: recurrence.  Each grid step consumes a (Tc, B, 4H) chunk of gates_x
# and runs an unrolled in-kernel loop; h/c are carried in the VMEM-resident
# output blocks (constant index_map), initialized at grid step 0.
# ----------------------------------------------------------------------------
def _lstm_seq_kernel(gx_ref, h0_ref, c0_ref, whh_ref, h_out_ref, c_out_ref):
    n = pl.program_id(0)

    @pl.when(n == 0)
    def _():
        h_out_ref[...] = h0_ref[...]
        c_out_ref[...] = c0_ref[...]

    whh = whh_ref[...]
    H = h_out_ref.shape[1]
    Tc = gx_ref.shape[0]

    def step(t, carry):
        h, c = carry
        gates = gx_ref[t] + jnp.dot(h, whh, preferred_element_type=jnp.float32)
        return _apply_gates(gates, c, H)

    h_fin, c_fin = lax.fori_loop(0, Tc, step,
                                 (h_out_ref[...], c_out_ref[...]),
                                 unroll=True)
    h_out_ref[...] = h_fin
    c_out_ref[...] = c_fin


def _pick_chunk(T, max_chunk):
    tc = min(T, max_chunk)
    while T % tc:
        tc -= 1
    return tc


def encoder_rnn_sequence(xs, hidden, params, *, max_chunk=16):
    """Apply the EncoderRNN cell over xs[0..T-1]; returns the final (h, c).

    Equivalent to T calls of encoder_rnn_forward, but: the input projection is
    one batched matmul, weights stay VMEM-resident, and timesteps are chunked
    so the serial grid only pays launch/pipeline overhead every Tc steps.
    """
    h0, c0 = hidden
    T, B, I = xs.shape
    H = h0.shape[1]
    G = params["w_ihg"].shape[1]                       # 4H

    gates_x = _compute_gates_x(xs.reshape(T * B, I), params).reshape(T, B, G)

    Tc = _pick_chunk(T, max_chunk)
    out_shape = (jax.ShapeDtypeStruct((B, H), jnp.float32),
                 jax.ShapeDtypeStruct((B, H), jnp.float32))
    return pl.pallas_call(
        _lstm_seq_kernel,
        out_shape=out_shape,
        grid_spec=pltpu.PrefetchScalarGridSpec(
            num_scalar_prefetch=0,
            grid=(T // Tc,),
            in_specs=[
                pl.BlockSpec((Tc, B, G), lambda n: (n, 0, 0)),   # gates_x chunk
                pl.BlockSpec((B, H), lambda n: (0, 0)),          # h0 (resident)
                pl.BlockSpec((B, H), lambda n: (0, 0)),          # c0 (resident)
                pl.BlockSpec((H, G), lambda n: (0, 0)),          # W_hh^T (resident)
            ],
            out_specs=(pl.BlockSpec((B, H), lambda n: (0, 0)),
                       pl.BlockSpec((B, H), lambda n: (0, 0))),
        ),
        # The chunk axis carries the recurrence -> must stay "arbitrary".
        compiler_params=pltpu.CompilerParams(
            dimension_semantics=("arbitrary",)),
    )(gates_x, h0, c0, params["w_hhg"])


# ----------------------------------------------------------------------------
# Parameters & pure-JAX reference (PyTorch-layout weights, unpermuted).
# ----------------------------------------------------------------------------
def init_params(key, input_size=2, embedding_size=8, hidden_size=16):
    """Synthetic parameters with PyTorch-equivalent shapes.

    nn.Linear(I, E):    weight (E, I), bias (E,)
    nn.LSTMCell(E, H):  weight_ih (4H, E), weight_hh (4H, H), bias_ih/hh (4H,)
    Kernel params are pre-transposed; gate columns are permuted [i, f, g, o] ->
    [i, f, o, g] and the two biases summed (host-side, zero runtime cost).
    """
    H = hidden_size
    k1, k2, k3, k4, k5, k6 = jax.random.split(key, 6)
    scale = 0.1
    w1 = scale * jax.random.normal(k1, (embedding_size, input_size), jnp.float32)
    b1 = scale * jax.random.normal(k2, (embedding_size,), jnp.float32)
    w_ih = scale * jax.random.normal(k3, (4 * H, embedding_size), jnp.float32)
    w_hh = scale * jax.random.normal(k4, (4 * H, H), jnp.float32)
    b_ih = scale * jax.random.normal(k5, (4 * H,), jnp.float32)
    b_hh = scale * jax.random.normal(k6, (4 * H,), jnp.float32)

    perm = jnp.concatenate([jnp.arange(0, H), jnp.arange(H, 2 * H),
                            jnp.arange(3 * H, 4 * H), jnp.arange(2 * H, 3 * H)])
    params = {
        "w1_t": w1.T,                                    # (I, E)
        "b1": b1.reshape(1, embedding_size),             # (1, E)
        "w_ihg": w_ih.T[:, perm],                        # (E, 4H) [i,f,o,g]
        "w_hhg": w_hh.T[:, perm],                        # (H, 4H) [i,f,o,g]
        "b_gates": (b_ih + b_hh)[perm].reshape(1, 4 * H),
    }
    raw = {"w1": w1, "b1": b1, "w_ih": w_ih, "w_hh": w_hh,
           "b_ih": b_ih, "b_hh": b_hh}
    return params, raw


def _reference_step(x, hidden, raw):
    """Pure-JAX reference mirroring PyTorch LSTMCell semantics exactly."""
    h, c = hidden
    H = h.shape[1]
    emb = jnp.maximum(x @ raw["w1"].T + raw["b1"], 0.0)
    gates = emb @ raw["w_ih"].T + h @ raw["w_hh"].T + raw["b_ih"] + raw["b_hh"]
    i = jax.nn.sigmoid(gates[:, :H])
    f = jax.nn.sigmoid(gates[:, H:2 * H])
    g = jnp.tanh(gates[:, 2 * H:3 * H])
    o = jax.nn.sigmoid(gates[:, 3 * H:])
    c_new = f * c + i * g
    h_new = o * jnp.tanh(c_new)
    return h_new, c_new


if __name__ == "__main__":
    input_size, embedding_size, hidden_size = 2, 8, 16
    batch, seq_len = 2, 8

    key = jax.random.PRNGKey(0)
    kx, kh, kc, kp, ks = jax.random.split(key, 5)
    x = jax.random.normal(kx, (batch, input_size), jnp.float32)
    h0 = jax.random.normal(kh, (batch, hidden_size), jnp.float32)
    c0 = jax.random.normal(kc, (batch, hidden_size), jnp.float32)
    xs = jax.random.normal(ks, (seq_len, batch, input_size), jnp.float32)
    params, raw = init_params(kp, input_size, embedding_size, hidden_size)

    # References first (the single-step kernel donates h0/c0 in place).
    h_ref, c_ref = _reference_step(x, (h0, c0), raw)
    hs_ref, cs_ref = h0, c0
    for t in range(seq_len):
        hs_ref, cs_ref = _reference_step(xs[t], (hs_ref, cs_ref), raw)

    # Sequence kernel (hoisted input projection + chunked recurrence).
    h_fin, c_fin = encoder_rnn_sequence(xs, (h0, c0), params)
    jax.block_until_ready((h_fin, c_fin))
    assert jnp.allclose(h_fin, hs_ref, atol=1e-4), "sequence h mismatch"
    assert jnp.allclose(c_fin, cs_ref, atol=1e-4), "sequence c mismatch"

    # Single-step kernel (module-parity forward; called last — donates h0/c0).
    h_new, c_new = encoder_rnn_forward(x, (h0, c0), params)
    jax.block_until_ready((h_new, c_new))
    assert jnp.allclose(h_new, h_ref, atol=1e-5), "step h mismatch"
    assert jnp.allclose(c_new, c_ref, atol=1e-5), "step c mismatch"

    print("KERNEL_OK")
</pallas_src>

<mosaic_0001>
module attributes {stable_mosaic.version = 11 : i64} {
  func.func @_gates_x_kernel(%arg0: i32, %arg1: memref<16x2xf32, #tpu.memory_space<vmem>>, %arg2: memref<2x8xf32, #tpu.memory_space<vmem>>, %arg3: memref<1x8xf32, #tpu.memory_space<vmem>>, %arg4: memref<8x64xf32, #tpu.memory_space<vmem>>, %arg5: memref<1x64xf32, #tpu.memory_space<vmem>>, %arg6: memref<16x64xf32, #tpu.memory_space<vmem>>) attributes {dimension_semantics = [#tpu.dimension_semantics<parallel>], iteration_bounds = array<i64: 1>, scalar_prefetch = 0 : i64, scratch_operands = 0 : i64, tpu.core_type = #tpu.core_type<tc>, window_params = [{transform_indices = @transform_0, window_bounds = array<i64: 16, 2>}, {pipeline_mode = #tpu.pipeline_mode<synchronous>, transform_indices = @transform_1, window_bounds = array<i64: 2, 8>}, {pipeline_mode = #tpu.pipeline_mode<synchronous>, transform_indices = @transform_2, window_bounds = array<i64: 1, 8>}, {pipeline_mode = #tpu.pipeline_mode<synchronous>, transform_indices = @transform_3, window_bounds = array<i64: 8, 64>}, {pipeline_mode = #tpu.pipeline_mode<synchronous>, transform_indices = @transform_4, window_bounds = array<i64: 1, 64>}, {transform_indices = @transform_5, window_bounds = array<i64: 16, 64>}]} {
    %c0 = arith.constant 0 : index
    %c0_0 = arith.constant 0 : index
    %0 = vector.load %arg1[%c0, %c0_0] : memref<16x2xf32, #tpu.memory_space<vmem>>, vector<16x2xf32>
    %c0_1 = arith.constant 0 : index
    %c0_2 = arith.constant 0 : index
    %1 = vector.load %arg2[%c0_1, %c0_2] : memref<2x8xf32, #tpu.memory_space<vmem>>, vector<2x8xf32>
    %cst = arith.constant dense<0.000000e+00> : vector<16x8xf32>
    %2 = tpu.matmul %0, %1, %cst {dimension_numbers = #tpu.dot_dimension_numbers<[1], [0], [0], [1], [0, 0, 1, 1], [], []>} : vector<16x2xf32>, vector<2x8xf32>, vector<16x8xf32> -> vector<16x8xf32>
    %c0_3 = arith.constant 0 : index
    %c0_4 = arith.constant 0 : index
    %3 = vector.load %arg3[%c0_3, %c0_4] : memref<1x8xf32, #tpu.memory_space<vmem>>, vector<1x8xf32>
    %4 = vector.broadcast %3 : vector<1x8xf32> to vector<16x8xf32>
    %5 = arith.addf %2, %4 : vector<16x8xf32>
    %cst_5 = arith.constant 0.000000e+00 : f32
    %6 = vector.broadcast %cst_5 : f32 to vector<16x8xf32>
    %7 = arith.maximumf %5, %6 : vector<16x8xf32>
    %c0_6 = arith.constant 0 : index
    %c0_7 = arith.constant 0 : index
    %8 = vector.load %arg4[%c0_6, %c0_7] : memref<8x64xf32, #tpu.memory_space<vmem>>, vector<8x64xf32>
    %cst_8 = arith.constant dense<0.000000e+00> : vector<16x64xf32>
    %9 = tpu.matmul %7, %8, %cst_8 {dimension_numbers = #tpu.dot_dimension_numbers<[1], [0], [0], [1], [0, 0, 1, 1], [], []>} : vector<16x8xf32>, vector<8x64xf32>, vector<16x64xf32> -> vector<16x64xf32>
    %c0_9 = arith.constant 0 : index
    %c0_10 = arith.constant 0 : index
    %10 = vector.load %arg5[%c0_9, %c0_10] : memref<1x64xf32, #tpu.memory_space<vmem>>, vector<1x64xf32>
    %11 = vector.broadcast %10 : vector<1x64xf32> to vector<16x64xf32>
    %12 = arith.addf %9, %11 : vector<16x64xf32>
    %c0_11 = arith.constant 0 : index
    %c0_12 = arith.constant 0 : index
    %13 = vector.load %arg6[%c0_11, %c0_12] : memref<16x64xf32, #tpu.memory_space<vmem>>, vector<16x64xf32>
    tpu.vector_store %arg6[%c0_11, %c0_12], %12 {strides = array<i32>} : memref<16x64xf32, #tpu.memory_space<vmem>>, vector<16x64xf32>,
    return
  }
  func.func @transform_0(%arg0: i32) -> (i32, i32) {
    %c0_i32 = arith.constant 0 : i32
    %c0_i32_0 = arith.constant 0 : i32
    return %arg0, %c0_i32 : i32, i32
  }
  func.func @transform_1(%arg0: i32) -> (i32, i32) {
    %c0_i32 = arith.constant 0 : i32
    %c0_i32_0 = arith.constant 0 : i32
    %c0_i32_1 = arith.constant 0 : i32
    return %c0_i32, %c0_i32_0 : i32, i32
  }
  func.func @transform_2(%arg0: i32) -> (i32, i32) {
    %c0_i32 = arith.constant 0 : i32
    %c0_i32_0 = arith.constant 0 : i32
    %c0_i32_1 = arith.constant 0 : i32
    return %c0_i32, %c0_i32_0 : i32, i32
  }
  func.func @transform_3(%arg0: i32) -> (i32, i32) {
    %c0_i32 = arith.constant 0 : i32
    %c0_i32_0 = arith.constant 0 : i32
    %c0_i32_1 = arith.constant 0 : i32
    return %c0_i32, %c0_i32_0 : i32, i32
  }
  func.func @transform_4(%arg0: i32) -> (i32, i32) {
    %c0_i32 = arith.constant 0 : i32
    %c0_i32_0 = arith.constant 0 : i32
    %c0_i32_1 = arith.constant 0 : i32
    return %c0_i32, %c0_i32_0 : i32, i32
  }
  func.func @transform_5(%arg0: i32) -> (i32, i32) {
    %c0_i32 = arith.constant 0 : i32
    %c0_i32_0 = arith.constant 0 : i32
    return %arg0, %c0_i32 : i32, i32
  }
}

</mosaic_0001>

<llo_original>
// kernel: tpu_custom_call.1
$region0: #{tpu_custom_call.1}
  #allocation0 [shape = 'u32[]', space=smem, size = 0x4, offset = 0x4, fixed_abs, tag = 'smem constant byte address 0x4 - core index']
  #allocation1 [shape = 'u32[72,128]{1,0:T(1,128)}', space=vmem, size = 0x9000, scoped, tag = 'internal scratch']
  %s0 = inlined_call_operand.vmem [shape: f32[16,2], index: 0, kind: input, shape index: {}]
  %s1 = inlined_call_operand.vmem [shape: f32[2,8], index: 1, kind: input, shape index: {}]
  %s2 = inlined_call_operand.vmem [shape: f32[1,8], index: 2, kind: input, shape index: {}]
  %s3 = inlined_call_operand.vmem [shape: f32[8,64], index: 3, kind: input, shape index: {}]
  %s4 = inlined_call_operand.vmem [shape: f32[1,64], index: 4, kind: input, shape index: {}]
  %s5 = inlined_call_operand.hbm [shape: f32[16,64], index: 5, kind: output, shape index: {}]
  %s6 = sld [smem:[#allocation0]]
  $region30: #{tpu_custom_call.1} parent=0
    _
  %s8 = ssub.s32 1, %s6
  %s9 = scalar_select 0, %s8, %s6
  $region1: #{tpu_custom_call.1} parent=0
    #allocation2 [shape = 'u8[8192]{0}', space=vmem, size = 0x2000, scoped, tag = 'output window, operand 0, single buffered']
    #allocation3 [shape = 's32[1]{0}', space=sflag, size = 0x4, scoped, tag = 'scoped memory for tpu_custom_call.1']
    %10 = vsyncpa [#allocation3], 0
    // Predicated region
    $region2: #{tpu_custom_call.1} parent=1 // pred_check
      _
    $region3: #{tpu_custom_call.1} parent=1 // pred_check_branch
      %12 = sbr.rel (0) target = $region5
    $region4: #{tpu_custom_call.1} parent=1 // pred_region
      _
    $region5: #{tpu_custom_call.1} parent=1 // pred_fallthru
      _
    // Predicated region
    $region6: #{tpu_custom_call.1} parent=1 // pred_check
      _
    $region7: #{tpu_custom_call.1} parent=1 // pred_check_branch
      %14 = sbr.rel (0) target = $region9
    $region8: #{tpu_custom_call.1} parent=1 // pred_region
      _
    $region9: #{tpu_custom_call.1} parent=1 // pred_fallthru
      _
    // Predicated region
    $region10: #{tpu_custom_call.1} parent=1 // pred_check
      _
    $region11: #{tpu_custom_call.1} parent=1 // pred_check_branch
      %16 = sbr.rel (0) target = $region13
    $region12: #{tpu_custom_call.1} parent=1 // pred_region
      _
    $region13: #{tpu_custom_call.1} parent=1 // pred_fallthru
      _
    // Predicated region
    $region14: #{tpu_custom_call.1} parent=1 // pred_check
      _
    $region15: #{tpu_custom_call.1} parent=1 // pred_check_branch
      %18 = sbr.rel (0) target = $region17
    $region16: #{tpu_custom_call.1} parent=1 // pred_region
      _
    $region17: #{tpu_custom_call.1} parent=1 // pred_fallthru
      _
    // Predicated region
    $region18: #{tpu_custom_call.1} parent=1 // pred_check
      _
    $region19: #{tpu_custom_call.1} parent=1 // pred_check_branch
      %20 = sbr.rel (0) target = $region21
    $region20: #{tpu_custom_call.1} parent=1 // pred_region
      _
    $region21: #{tpu_custom_call.1} parent=1 // pred_fallthru
      _
    %v21 = vld [vmem:[%s0] sm:$0xff]
    %v22 = vld [vmem:[%s0 + $0x8] sm:$0xff]
    %v23 = vld [vmem:[%s1] sm:$0x3]
    %v24 = vld [vmem:[%s2] sm:$0x1]
    %v26 = vperm.slane %v24, 0
    %vm28 = vcmask 15360
    %v30 = vsel %vm28, %v21, 0
    %v33 = vsel %vm28, %v22, 0
    %vm35 = vcmask 1041408
    %v37 = vsel %vm35, %v23, 0
    %39 = vmatpush.msra.mxu0 0.0
    %40 = vmatpush.msra.mxu0 0.0
    %41 = vmatpush.msra.mxu0 0.0
    %42 = vmatpush.msra.mxu0 0.0
    %43 = vmatpush.msra.mxu0 0.0
    %44 = vmatpush.msra.mxu0 0.0
    %45 = vmatpush.msra.mxu0 0.0
    %46 = vmatpush.msra.mxu0 0.0
    %47 = vmatpush.msra.mxu0 0.0
    %48 = vmatpush.msra.mxu0 0.0
    %49 = vmatpush.msra.mxu0 0.0
    %50 = vmatpush.msra.mxu0 0.0
    %51 = vmatpush.msra.mxu0 0.0
    %52 = vmatpush.msra.mxu0 0.0
    %53 = vmatpush.msra.mxu0 0.0
    %54 = vmatpush.msra.mxu0 %v37
    %55 = vmatmul.f32.gmra.mxu0 %v30
    %v56 = vpop.f32.mrf.mxu0
    %v57 = vadd.f32 %v26, %v56
    %58 = vmatmul.f32.gmra.mxu0 %v33
    %v59 = vpop.f32.mrf.mxu0
    %v60 = vadd.f32 %v26, %v59
    %61 = vdwg.mxu0
    %v62 = vmax.f32 %v57, 0.0
    %v63 = vmax.f32 %v60, 0.0
    %v64 = vld [vmem:[%s3] sm:$0xff]
    %v65 = vld [vmem:[%s4] sm:$0x1]
    %v67 = vperm.slane %v65, 0
    %vm69 = vcmask 64512
    %v71 = vsel %vm69, %v62, 0
    %v74 = vsel %vm69, %v63, 0
    %76 = vmatpush.msra.mxu0 0.0
    %77 = vmatpush.msra.mxu0 0.0
    %78 = vmatpush.msra.mxu0 0.0
    %79 = vmatpush.msra.mxu0 0.0
    %80 = vmatpush.msra.mxu0 0.0
    %81 = vmatpush.msra.mxu0 0.0
    %82 = vmatpush.msra.mxu0 0.0
    %83 = vmatpush.msra.mxu0 0.0
    %84 = vmatpush.msra.mxu0 0.0
    %85 = vmatpush.msra.mxu0 0.0
    %86 = vmatpush.msra.mxu0 0.0
    %87 = vmatpush.msra.mxu0 0.0
    %88 = vmatpush.msra.mxu0 0.0
    %89 = vmatpush.msra.mxu0 0.0
    %90 = vmatpush.msra.mxu0 0.0
    %91 = vmatpush.msra.mxu0 %v64
    %92 = vmatmul.f32.gmra.mxu0 %v71
    %v93 = vpop.f32.mrf.mxu0
    %v94 = vadd.f32 %v67, %v93
    %95 = vmatmul.f32.gmra.mxu0 %v74
    %v96 = vpop.f32.mrf.mxu0
    %v97 = vadd.f32 %v67, %v96
    %98 = vdwg.mxu0
    %vm99 = vcmask 523264
    %100 = vst.msk [vmem:[#allocation2] sm:$0xff] %vm99, %v94
    %101 = vst.msk [vmem:[#allocation2 + $0x8] sm:$0xff] %vm99, %v97
    // Predicated region
    $region22: #{tpu_custom_call.1} parent=1 // pred_check
      _
    $region23: #{tpu_custom_call.1} parent=1 // pred_check_branch
      %103 = sbr.rel (0) target = $region25
    $region24: #{tpu_custom_call.1} parent=1 // pred_region
      %105 = vsyncadd [#allocation3], 0
      %s106 = sshll.u32 [#allocation2], 4
      %s107 = int_to_ptr.vmem [resolvable:$true] %s106
      %s108 = sshll.u32 %s5, 4
      %s109 = int_to_ptr.hbm [resolvable:$true] %s108
      %114 = dma.vmem_to_hbm [thread:$0]  %s107, 256, %s109, [#allocation3], 128, 128, 8
    $region25: #{tpu_custom_call.1} parent=1 // pred_fallthru
      _
    // Predicated region
    $region26: #{tpu_custom_call.1} parent=1 // pred_check
      _
    $region27: #{tpu_custom_call.1} parent=1 // pred_check_branch
      %116 = sbr.rel (0) target = $region29
    $region28: #{tpu_custom_call.1} parent=1 // pred_region
      %118 = dma.done [#allocation3], 256
    $region29: #{tpu_custom_call.1} parent=1 // pred_fallthru
      _
    %119 = vsyncpa [#allocation3], 1

</llo_original>
